<compile_context>
chip_gen: v6e
topology: v6e:2x2x1
jax: 0.10.0
libtpu: 0.0.40
codegen_flags: <defaults>
</compile_context>

<pallas_src>
import jax
import jax.numpy as jnp
from jax.experimental import pallas as pl
from jax.experimental.pallas import tpu as pltpu


def _round_up(v, m):
    return (v + m - 1) // m * m


def decoder_kernel(x_ref, w1_ref, b1_ref, w2_ref, b2_ref, out_ref):
    """One batch tile: (x @ W1 + b1) -> ReLU -> (@ W2 + b2) -> sigmoid."""
    x = x_ref[...]
    # MXU matmul with f32 accumulation regardless of operand dtype.
    h = jnp.dot(x, w1_ref[...], preferred_element_type=jnp.float32)
    h = jnp.maximum(h + b1_ref[...], 0.0)        # bias + ReLU in f32 (VPU/EUP-safe on v5e)
    h = h.astype(w2_ref.dtype)                   # match 2nd matmul operand dtype (bf16 path)
    y = jnp.dot(h, w2_ref[...], preferred_element_type=jnp.float32)
    y = y + b2_ref[...]                          # bias add in f32
    out_ref[...] = jax.nn.sigmoid(y).astype(out_ref.dtype)   # sigmoid in f32


def decoder_forward(x, w1, b1, w2, b2, *, block_b=1024):
    """x: [B, latent+classes]; w1: [in, hidden]; w2: [hidden, out]; biases [1, *]."""
    B, in_dim = x.shape
    hidden_dim = w1.shape[1]
    out_dim = w2.shape[1]

    # ---- batch tile: as large as practical (amortizes ~0.35us/grid-step), multiple of 8.
    tb = _round_up(min(block_b, _round_up(B, 8)), 8)
    grid_b = pl.cdiv(B, tb)
    b_pad = grid_b * tb
    if b_pad != B:
        x = jnp.pad(x, ((0, b_pad - B), (0, 0)))

    # ---- lane-dense output: pad output columns to a multiple of 128 so the
    # stored slab's last dim is lane-dense (unmasked vst); slice off outside.
    out_dim_p = _round_up(out_dim, 128)
    if out_dim_p != out_dim:
        w2 = jnp.pad(w2, ((0, 0), (0, out_dim_p - out_dim)))
        b2 = jnp.pad(b2, ((0, 0), (0, out_dim_p - out_dim)))

    x_bytes = x.dtype.itemsize
    w_bytes = w1.dtype.itemsize

    # ---- VMEM budget: 2x double-buffered x/out tiles + resident weights + intermediates.
    vmem_need = (
        2 * tb * in_dim * x_bytes
        + 2 * tb * out_dim_p * 4
        + in_dim * hidden_dim * w_bytes
        + hidden_dim * out_dim_p * w_bytes
        + (hidden_dim + out_dim_p) * 4
        + tb * (hidden_dim + out_dim_p) * 4
    )
    vmem_limit = int(min(max(2 * vmem_need, 32 << 20), 64 << 20))  # stay within v7x's 64 MiB

    cost = pl.CostEstimate(
        flops=2 * B * (in_dim * hidden_dim + hidden_dim * out_dim_p),
        transcendentals=B * out_dim_p,
        bytes_accessed=(
            B * in_dim * x_bytes
            + B * out_dim_p * 4
            + (in_dim * hidden_dim + hidden_dim * out_dim_p) * w_bytes
            + (hidden_dim + out_dim_p) * 4
        ),
    )

    out = pl.pallas_call(
        decoder_kernel,
        out_shape=jax.ShapeDtypeStruct((b_pad, out_dim_p), jnp.float32),
        grid=(grid_b,),
        in_specs=[
            pl.BlockSpec((tb, in_dim), lambda i: (i, 0)),            # x tile (pipelined)
            pl.BlockSpec((in_dim, hidden_dim), lambda i: (0, 0)),    # W1 resident
            pl.BlockSpec((1, hidden_dim), lambda i: (0, 0)),         # b1 resident
            pl.BlockSpec((hidden_dim, out_dim_p), lambda i: (0, 0)), # W2 resident
            pl.BlockSpec((1, out_dim_p), lambda i: (0, 0)),          # b2 resident
        ],
        out_specs=pl.BlockSpec((tb, out_dim_p), lambda i: (i, 0)),
        compiler_params=pltpu.CompilerParams(
            dimension_semantics=("parallel",),       # shard batch axis across v7x's 2 TCs
            vmem_limit_bytes=vmem_limit,
        ),
        cost_estimate=cost,
    )(x, w1, b1, w2, b2)

    # Slice away batch padding and lane padding outside the kernel.
    return out[:B, :out_dim]


def init_decoder_params(key, in_dim, hidden_dim, output_dim):
    """Deterministic synthetic params matching PyTorch Linear init ranges.

    PyTorch stores Linear weight as [out, in]; we keep the transposed
    [in, out] layout so the kernel does x @ W.
    """
    k1, k2, k3, k4 = jax.random.split(key, 4)
    s1 = 1.0 / jnp.sqrt(in_dim)
    s2 = 1.0 / jnp.sqrt(hidden_dim)
    w1 = jax.random.uniform(k1, (in_dim, hidden_dim), jnp.float32, -s1, s1)
    b1 = jax.random.uniform(k2, (1, hidden_dim), jnp.float32, -s1, s1)
    w2 = jax.random.uniform(k3, (hidden_dim, output_dim), jnp.float32, -s2, s2)
    b2 = jax.random.uniform(k4, (1, output_dim), jnp.float32, -s2, s2)
    return w1, b1, w2, b2


if __name__ == "__main__":
    # Small shapes implied by the module: latent_dim=16, n_classes=4,
    # hidden_dim=32, output_dim=64, batch=8.
    latent_dim, n_classes, hidden_dim, output_dim = 16, 4, 32, 64
    in_dim = latent_dim + n_classes
    batch = 8

    key = jax.random.PRNGKey(0)
    kx, kp = jax.random.split(key)
    x = jax.random.normal(kx, (batch, in_dim), jnp.float32)
    w1, b1, w2, b2 = init_decoder_params(kp, in_dim, hidden_dim, output_dim)

    # Pure-JAX reference (same semantics as the PyTorch forward).
    ref = jax.nn.sigmoid(jnp.maximum(x @ w1 + b1, 0.0) @ w2 + b2)

    # f32 operand path: exact-precision check.
    out_f32 = decoder_forward(x, w1, b1, w2, b2)
    jax.block_until_ready(out_f32)
    assert out_f32.shape == (batch, output_dim)
    assert jnp.allclose(out_f32, ref, atol=1e-5, rtol=1e-5)

    # bf16 operand path (halved HBM traffic / VMEM; f32 accumulation & epilogue).
    out_bf16 = decoder_forward(
        x.astype(jnp.bfloat16),
        w1.astype(jnp.bfloat16), b1,
        w2.astype(jnp.bfloat16), b2,
    )
    jax.block_until_ready(out_bf16)
    assert out_bf16.shape == (batch, output_dim)
    assert jnp.allclose(out_bf16, ref, atol=5e-2, rtol=5e-2)

    print("KERNEL_OK")
</pallas_src>

<mosaic_0001>
module attributes {stable_mosaic.version = 11 : i64} {
  func.func @decoder_kernel(%arg0: i32, %arg1: memref<8x20xf32, #tpu.memory_space<vmem>>, %arg2: memref<20x32xf32, #tpu.memory_space<vmem>>, %arg3: memref<1x32xf32, #tpu.memory_space<vmem>>, %arg4: memref<32x128xf32, #tpu.memory_space<vmem>>, %arg5: memref<1x128xf32, #tpu.memory_space<vmem>>, %arg6: memref<8x128xf32, #tpu.memory_space<vmem>>) attributes {dimension_semantics = [#tpu.dimension_semantics<parallel>], iteration_bounds = array<i64: 1>, scalar_prefetch = 0 : i64, scratch_operands = 0 : i64, tpu.core_type = #tpu.core_type<tc>, window_params = [{transform_indices = @transform_0, window_bounds = array<i64: 8, 20>}, {pipeline_mode = #tpu.pipeline_mode<synchronous>, transform_indices = @transform_1, window_bounds = array<i64: 20, 32>}, {pipeline_mode = #tpu.pipeline_mode<synchronous>, transform_indices = @transform_2, window_bounds = array<i64: 1, 32>}, {pipeline_mode = #tpu.pipeline_mode<synchronous>, transform_indices = @transform_3, window_bounds = array<i64: 32, 128>}, {pipeline_mode = #tpu.pipeline_mode<synchronous>, transform_indices = @transform_4, window_bounds = array<i64: 1, 128>}, {transform_indices = @transform_5, window_bounds = array<i64: 8, 128>}]} {
    %c0 = arith.constant 0 : index
    %c0_0 = arith.constant 0 : index
    %0 = vector.load %arg1[%c0, %c0_0] : memref<8x20xf32, #tpu.memory_space<vmem>>, vector<8x20xf32>
    %c0_1 = arith.constant 0 : index
    %c0_2 = arith.constant 0 : index
    %1 = vector.load %arg2[%c0_1, %c0_2] : memref<20x32xf32, #tpu.memory_space<vmem>>, vector<20x32xf32>
    %cst = arith.constant dense<0.000000e+00> : vector<8x32xf32>
    %2 = tpu.matmul %0, %1, %cst {dimension_numbers = #tpu.dot_dimension_numbers<[1], [0], [0], [1], [0, 0, 1, 1], [], []>} : vector<8x20xf32>, vector<20x32xf32>, vector<8x32xf32> -> vector<8x32xf32>
    %c0_3 = arith.constant 0 : index
    %c0_4 = arith.constant 0 : index
    %3 = vector.load %arg3[%c0_3, %c0_4] : memref<1x32xf32, #tpu.memory_space<vmem>>, vector<1x32xf32>
    %4 = vector.broadcast %3 : vector<1x32xf32> to vector<8x32xf32>
    %5 = arith.addf %2, %4 : vector<8x32xf32>
    %cst_5 = arith.constant 0.000000e+00 : f32
    %6 = vector.broadcast %cst_5 : f32 to vector<8x32xf32>
    %7 = arith.maximumf %5, %6 : vector<8x32xf32>
    %c0_6 = arith.constant 0 : index
    %c0_7 = arith.constant 0 : index
    %8 = vector.load %arg4[%c0_6, %c0_7] : memref<32x128xf32, #tpu.memory_space<vmem>>, vector<32x128xf32>
    %cst_8 = arith.constant dense<0.000000e+00> : vector<8x128xf32>
    %9 = tpu.matmul %7, %8, %cst_8 {dimension_numbers = #tpu.dot_dimension_numbers<[1], [0], [0], [1], [0, 0, 1, 1], [], []>} : vector<8x32xf32>, vector<32x128xf32>, vector<8x128xf32> -> vector<8x128xf32>
    %c0_9 = arith.constant 0 : index
    %c0_10 = arith.constant 0 : index
    %10 = vector.load %arg5[%c0_9, %c0_10] : memref<1x128xf32, #tpu.memory_space<vmem>>, vector<1x128xf32>
    %11 = vector.broadcast %10 : vector<1x128xf32> to vector<8x128xf32>
    %12 = arith.addf %9, %11 : vector<8x128xf32>
    %13 = arith.negf %12 : vector<8x128xf32>
    %14 = math.exp %13 : vector<8x128xf32>
    %cst_11 = arith.constant 1.000000e+00 : f32
    %15 = vector.broadcast %cst_11 : f32 to vector<8x128xf32>
    %16 = arith.addf %15, %14 : vector<8x128xf32>
    %17 = arith.divf %15, %16 : vector<8x128xf32>
    %c0_12 = arith.constant 0 : index
    %c0_13 = arith.constant 0 : index
    %18 = vector.load %arg6[%c0_12, %c0_13] : memref<8x128xf32, #tpu.memory_space<vmem>>, vector<8x128xf32>
    tpu.vector_store %arg6[%c0_12, %c0_13], %17 {strides = array<i32>} : memref<8x128xf32, #tpu.memory_space<vmem>>, vector<8x128xf32>,
    return
  }
  func.func @transform_0(%arg0: i32) -> (i32, i32) {
    %c0_i32 = arith.constant 0 : i32
    %c0_i32_0 = arith.constant 0 : i32
    return %arg0, %c0_i32 : i32, i32
  }
  func.func @transform_1(%arg0: i32) -> (i32, i32) {
    %c0_i32 = arith.constant 0 : i32
    %c0_i32_0 = arith.constant 0 : i32
    %c0_i32_1 = arith.constant 0 : i32
    return %c0_i32, %c0_i32_0 : i32, i32
  }
  func.func @transform_2(%arg0: i32) -> (i32, i32) {
    %c0_i32 = arith.constant 0 : i32
    %c0_i32_0 = arith.constant 0 : i32
    %c0_i32_1 = arith.constant 0 : i32
    return %c0_i32, %c0_i32_0 : i32, i32
  }
  func.func @transform_3(%arg0: i32) -> (i32, i32) {
    %c0_i32 = arith.constant 0 : i32
    %c0_i32_0 = arith.constant 0 : i32
    %c0_i32_1 = arith.constant 0 : i32
    return %c0_i32, %c0_i32_0 : i32, i32
  }
  func.func @transform_4(%arg0: i32) -> (i32, i32) {
    %c0_i32 = arith.constant 0 : i32
    %c0_i32_0 = arith.constant 0 : i32
    %c0_i32_1 = arith.constant 0 : i32
    return %c0_i32, %c0_i32_0 : i32, i32
  }
  func.func @transform_5(%arg0: i32) -> (i32, i32) {
    %c0_i32 = arith.constant 0 : i32
    %c0_i32_0 = arith.constant 0 : i32
    return %arg0, %c0_i32 : i32, i32
  }
}

</mosaic_0001>

<llo_original>
// kernel: tpu_custom_call.1
$region0: #{tpu_custom_call.1}
  #allocation0 [shape = 'u32[]', space=smem, size = 0x4, offset = 0x4, fixed_abs, tag = 'smem constant byte address 0x4 - core index']
  #allocation1 [shape = 'u32[144,128]{1,0:T(1,128)}', space=vmem, size = 0x12000, scoped, tag = 'internal scratch']
  %s0 = inlined_call_operand.hbm [shape: f32[8,20], index: 0, kind: input, shape index: {}]
  %s1 = inlined_call_operand.hbm [shape: f32[20,32], index: 1, kind: input, shape index: {}]
  %s2 = inlined_call_operand.vmem [shape: f32[1,32], index: 2, kind: input, shape index: {}]
  %s3 = inlined_call_operand.hbm [shape: f32[32,128], index: 3, kind: input, shape index: {}]
  %s4 = inlined_call_operand.vmem [shape: f32[1,128], index: 4, kind: input, shape index: {}]
  %s5 = inlined_call_operand.hbm [shape: f32[8,128], index: 5, kind: output, shape index: {}]
  %s6 = sld [smem:[#allocation0]]
  $region42: #{tpu_custom_call.1} parent=0
    _
  %s8 = ssub.s32 1, %s6
  %s9 = scalar_select 0, %s8, %s6
  $region1: #{tpu_custom_call.1} parent=0
    #allocation2 [shape = 'u8[4096]{0}', space=vmem, size = 0x1000, scoped, tag = 'input window, operand 0, single buffered']
    #allocation3 [shape = 's32[1]{0}', space=sflag, size = 0x4, scoped, tag = 'scoped memory for tpu_custom_call.1']
    #allocation4 [shape = 's32[1]{0}', space=sflag, size = 0x4, scoped, tag = 'scoped memory for tpu_custom_call.1']
    #allocation5 [shape = 'u8[12288]{0}', space=vmem, size = 0x3000, scoped, tag = 'input window, operand 1, single buffered']
    #allocation6 [shape = 's32[1]{0}', space=sflag, size = 0x4, scoped, tag = 'scoped memory for tpu_custom_call.1']
    #allocation7 [shape = 'u8[16384]{0}', space=vmem, size = 0x4000, scoped, tag = 'input window, operand 3, single buffered']
    #allocation8 [shape = 'u8[4096]{0}', space=vmem, size = 0x1000, scoped, tag = 'output window, operand 0, single buffered']
    %10 = vsyncpa [#allocation3], 0
    %11 = vsyncpa [#allocation6], 0
    %12 = vsyncpa [#allocation4], 0
    // Predicated region
    $region2: #{tpu_custom_call.1} parent=1 // pred_check
      _
    $region3: #{tpu_custom_call.1} parent=1 // pred_check_branch
      %14 = sbr.rel (0) target = $region5
    $region4: #{tpu_custom_call.1} parent=1 // pred_region
      %s16 = ssub.s32 128, 128
      %17 = vsyncadd [#allocation3], %s16
      %s19 = sshll.u32 [#allocation2], 4
      %s20 = int_to_ptr.vmem [resolvable:$true] %s19
      %22 = dma.hbm_to_vmem [thread:$0]  %s0, 128, %s20, [#allocation3]
    $region5: #{tpu_custom_call.1} parent=1 // pred_fallthru
      _
    // Predicated region
    $region6: #{tpu_custom_call.1} parent=1 // pred_check
      _
    $region7: #{tpu_custom_call.1} parent=1 // pred_check_branch
      %24 = sbr.rel (0) target = $region9
    $region8: #{tpu_custom_call.1} parent=1 // pred_region
      %s26 = ssub.s32 384, 384
      %27 = vsyncadd [#allocation6], %s26
      %s28 = sshll.u32 [#allocation5], 4
      %s29 = int_to_ptr.vmem [resolvable:$true] %s28
      %34 = dma.hbm_to_vmem [thread:$0]  %s1, 384, %s29, [#allocation6], 128, 128, 8
    $region9: #{tpu_custom_call.1} parent=1 // pred_fallthru
      _
    // Predicated region
    $region10: #{tpu_custom_call.1} parent=1 // pred_check
      _
    $region11: #{tpu_custom_call.1} parent=1 // pred_check_branch
      %36 = sbr.rel (0) target = $region13
    $region12: #{tpu_custom_call.1} parent=1 // pred_region
      _
    $region13: #{tpu_custom_call.1} parent=1 // pred_fallthru
      _
    // Predicated region
    $region14: #{tpu_custom_call.1} parent=1 // pred_check
      _
    $region15: #{tpu_custom_call.1} parent=1 // pred_check_branch
      %38 = sbr.rel (0) target = $region17
    $region16: #{tpu_custom_call.1} parent=1 // pred_region
      %s40 = ssub.s32 512, 512
      %41 = vsyncadd [#allocation6], %s40
      %s42 = sshll.u32 [#allocation7], 4
      %s43 = int_to_ptr.vmem [resolvable:$true] %s42
      %48 = dma.hbm_to_vmem [thread:$0]  %s3, 512, %s43, [#allocation6], 128, 128, 8
    $region17: #{tpu_custom_call.1} parent=1 // pred_fallthru
      _
    // Predicated region
    $region18: #{tpu_custom_call.1} parent=1 // pred_check
      _
    $region19: #{tpu_custom_call.1} parent=1 // pred_check_branch
      %50 = sbr.rel (0) target = $region21
    $region20: #{tpu_custom_call.1} parent=1 // pred_region
      _
    $region21: #{tpu_custom_call.1} parent=1 // pred_fallthru
      _
    // Predicated region
    $region22: #{tpu_custom_call.1} parent=1 // pred_check
      _
    $region23: #{tpu_custom_call.1} parent=1 // pred_check_branch
      %52 = sbr.rel (0) target = $region25
    $region24: #{tpu_custom_call.1} parent=1 // pred_region
      %53 = dma.done [#allocation3], 128
    $region25: #{tpu_custom_call.1} parent=1 // pred_fallthru
      _
    // Predicated region
    $region26: #{tpu_custom_call.1} parent=1 // pred_check
      _
    $region27: #{tpu_custom_call.1} parent=1 // pred_check_branch
      %55 = sbr.rel (0) target = $region29
    $region28: #{tpu_custom_call.1} parent=1 // pred_region
      %56 = dma.done [#allocation6], 384
    $region29: #{tpu_custom_call.1} parent=1 // pred_fallthru
      _
    // Predicated region
    $region30: #{tpu_custom_call.1} parent=1 // pred_check
      _
    $region31: #{tpu_custom_call.1} parent=1 // pred_check_branch
      %58 = sbr.rel (0) target = $region33
    $region32: #{tpu_custom_call.1} parent=1 // pred_region
      %59 = dma.done [#allocation6], 512
    $region33: #{tpu_custom_call.1} parent=1 // pred_fallthru
      _
    %v60 = vld [vmem:[#allocation2] sm:$0xff]
    %v61 = vld [vmem:[#allocation5] sm:$0xff]
    %v62 = vld [vmem:[#allocation5 + $0x8] sm:$0xff]
    %v63 = vld [vmem:[#allocation5 + $0x10] sm:$0xf]
    %v64 = vld [vmem:[%s2] sm:$0x1]
    %v66 = vlaneseq
    %v67 = vshrl.u32 %v66, 7
    %v68 = vsub.s32 0, %v67
    %v69 = vrot.slane %v64, %v68
    %vm71 = vcmask 162816
    %v73 = vsel %vm71, %v60, 0
    %vm75 = vcmask 1043456
    %v77 = vsel %vm75, %v63, 0
    %79 = vmatprep.subr.mxu0 0.0
    %80 = vmatpush1.msra.mxu0 0.0
    %81 = vmatprep.subr.mxu0 0.0
    %82 = vmatpush1.msra.mxu0 0.0
    %83 = vmatprep.subr.mxu0 0.0
    %84 = vmatpush1.msra.mxu0 0.0
    %85 = vmatprep.subr.mxu0 0.0
    %86 = vmatpush1.msra.mxu0 0.0
    %87 = vmatprep.subr.mxu0 0.0
    %88 = vmatpush1.msra.mxu0 0.0
    %89 = vmatprep.subr.mxu0 0.0
    %90 = vmatpush1.msra.mxu0 0.0
    %91 = vmatprep.subr.mxu0 0.0
    %92 = vmatpush1.msra.mxu0 0.0
    %93 = vmatprep.subr.mxu0 0.0
    %94 = vmatpush1.msra.mxu0 0.0
    %95 = vmatprep.subr.mxu0 0.0
    %96 = vmatpush1.msra.mxu0 0.0
    %97 = vmatprep.subr.mxu0 0.0
    %98 = vmatpush1.msra.mxu0 0.0
    %99 = vmatprep.subr.mxu0 0.0
    %100 = vmatpush1.msra.mxu0 0.0
    %101 = vmatprep.subr.mxu0 0.0
    %102 = vmatpush1.msra.mxu0 0.0
    %103 = vmatprep.subr.mxu0 0.0
    %104 = vmatpush1.msra.mxu0 0.0
    %105 = vmatprep.subr.mxu0 0.0
    %106 = vmatpush1.msra.mxu0 %v77
    %107 = vmatprep.subr.mxu0 0.0
    %108 = vmatpush1.msra.mxu0 %v62
    %109 = vmatprep.subr.mxu0 0.0
    %110 = vmatpush1.msra.mxu0 %v61
    %111 = vmatprep.subr.mxu0 0.0
    %112 = vmatpush2.msra.mxu0 0.0
    %113 = vmatprep.subr.mxu0 0.0
    %114 = vmatpush2.msra.mxu0 0.0
    %115 = vmatprep.subr.mxu0 0.0
    %116 = vmatpush2.msra.mxu0 0.0
    %117 = vmatprep.subr.mxu0 0.0
    %118 = vmatpush2.msra.mxu0 0.0
    %119 = vmatprep.subr.mxu0 0.0
    %120 = vmatpush2.msra.mxu0 0.0
    %121 = vmatprep.subr.mxu0 0.0
    %122 = vmatpush2.msra.mxu0 0.0
    %123 = vmatprep.subr.mxu0 0.0
    %124 = vmatpush2.msra.mxu0 0.0
    %125 = vmatprep.subr.mxu0 0.0
    %126 = vmatpush2.msra.mxu0 0.0
    %127 = vmatprep.subr.mxu0 0.0
    %128 = vmatpush2.msra.mxu0 0.0
    %129 = vmatprep.subr.mxu0 0.0
    %130 = vmatpush2.msra.mxu0 0.0
    %131 = vmatprep.subr.mxu0 0.0
    %132 = vmatpush2.msra.mxu0 0.0
    %133 = vmatprep.subr.mxu0 0.0
    %134 = vmatpush2.msra.mxu0 0.0
    %135 = vmatprep.subr.mxu0 0.0
    %136 = vmatpush2.msra.mxu0 0.0
    %137 = vmatprep.subr.mxu0 0.0
    %138 = vmatpush2.msra.mxu0 0.0
    %139 = vmatprep.subr.mxu0 0.0
    %140 = vmatpush2.msra.mxu0 0.0
    %141 = vmatprep.subr.mxu0 0.0
    %142 = vmatpush2.msra.mxu0 0.0
    %143 = vmatprep.mubr.f32.mxu0 0.0
    %144 = vmatmul.mubr.f32.gmra.mxu0 %v73
    %v145 = vpop.f32.mrf.mxu0
    %v146 = vadd.f32 %v69, %v145
    %v147 = vpop.f32.mrf.mxu0
    %148 = vdwg.mxu0
    %v149 = vmax.f32 %v146, 0.0
    %v150 = vld [vmem:[#allocation7] sm:$0xff]
    %v151 = vld [vmem:[#allocation7 + $0x8] sm:$0xff]
    %v152 = vld [vmem:[#allocation7 + $0x10] sm:$0xff]
    %v153 = vld [vmem:[#allocation7 + $0x18] sm:$0xff]
    %v154 = vld [vmem:[%s4] sm:$0x1]
    %v156 = vlaneseq
    %v157 = vshrl.u32 %v156, 7
    %v158 = vsub.s32 0, %v157
    %v159 = vrot.slane %v154, %v158
    %vm161 = vcmask 261120
    %v163 = vsel %vm161, %v149, 0
    %165 = vmatprep.subr.mxu0 0.0
    %166 = vmatpush1.msra.mxu0 0.0
    %167 = vmatprep.subr.mxu0 0.0
    %168 = vmatpush1.msra.mxu0 0.0
    %169 = vmatprep.subr.mxu0 0.0
    %170 = vmatpush1.msra.mxu0 0.0
    %171 = vmatprep.subr.mxu0 0.0
    %172 = vmatpush1.msra.mxu0 0.0
    %173 = vmatprep.subr.mxu0 0.0
    %174 = vmatpush1.msra.mxu0 0.0
    %175 = vmatprep.subr.mxu0 0.0
    %176 = vmatpush1.msra.mxu0 0.0
    %177 = vmatprep.subr.mxu0 0.0
    %178 = vmatpush1.msra.mxu0 0.0
    %179 = vmatprep.subr.mxu0 0.0
    %180 = vmatpush1.msra.mxu0 0.0
    %181 = vmatprep.subr.mxu0 0.0
    %182 = vmatpush1.msra.mxu0 0.0
    %183 = vmatprep.subr.mxu0 0.0
    %184 = vmatpush1.msra.mxu0 0.0
    %185 = vmatprep.subr.mxu0 0.0
    %186 = vmatpush1.msra.mxu0 0.0
    %187 = vmatprep.subr.mxu0 0.0
    %188 = vmatpush1.msra.mxu0 0.0
    %189 = vmatprep.subr.mxu0 0.0
    %190 = vmatpush1.msra.mxu0 %v153
    %191 = vmatprep.subr.mxu0 0.0
    %192 = vmatpush1.msra.mxu0 %v152
    %193 = vmatprep.subr.mxu0 0.0
    %194 = vmatpush1.msra.mxu0 %v151
    %195 = vmatprep.subr.mxu0 0.0
    %196 = vmatpush1.msra.mxu0 %v150
    %197 = vmatprep.subr.mxu0 0.0
    %198 = vmatpush2.msra.mxu0 0.0
    %199 = vmatprep.subr.mxu0 0.0
    %200 = vmatpush2.msra.mxu0 0.0
    %201 = vmatprep.subr.mxu0 0.0
    %202 = vmatpush2.msra.mxu0 0.0
    %203 = vmatprep.subr.mxu0 0.0
    %204 = vmatpush2.msra.mxu0 0.0
    %205 = vmatprep.subr.mxu0 0.0
    %206 = vmatpush2.msra.mxu0 0.0
    %207 = vmatprep.subr.mxu0 0.0
    %208 = vmatpush2.msra.mxu0 0.0
    %209 = vmatprep.subr.mxu0 0.0
    %210 = vmatpush2.msra.mxu0 0.0
    %211 = vmatprep.subr.mxu0 0.0
    %212 = vmatpush2.msra.mxu0 0.0
    %213 = vmatprep.subr.mxu0 0.0
    %214 = vmatpush2.msra.mxu0 0.0
    %215 = vmatprep.subr.mxu0 0.0
    %216 = vmatpush2.msra.mxu0 0.0
    %217 = vmatprep.subr.mxu0 0.0
    %218 = vmatpush2.msra.mxu0 0.0
    %219 = vmatprep.subr.mxu0 0.0
    %220 = vmatpush2.msra.mxu0 0.0
    %221 = vmatprep.subr.mxu0 0.0
    %222 = vmatpush2.msra.mxu0 0.0
    %223 = vmatprep.subr.mxu0 0.0
    %224 = vmatpush2.msra.mxu0 0.0
    %225 = vmatprep.subr.mxu0 0.0
    %226 = vmatpush2.msra.mxu0 0.0
    %227 = vmatprep.subr.mxu0 0.0
    %228 = vmatpush2.msra.mxu0 0.0
    %229 = vmatprep.mubr.f32.mxu0 0.0
    %230 = vmatmul.mubr.f32.gmra.mxu0 %v163
    %v231 = vpop.f32.mrf.mxu0
    %v232 = vadd.f32 %v159, %v231
    %v233 = vpop.f32.mrf.mxu0
    %234 = vdwg.mxu0
    %v235 = vxor.u32 %v232, 2147483648
    %v236 = vmul.f32 %v235, 1.442695
    %v237 = vpow.pop %v236
    %v238 = vadd.f32 %v237, 1.0
    %v239 = vrcp.pop %v238
    %v240 = vmul.f32 1.0, %v239
    %241 = vst [vmem:[#allocation8] sm:$0xff] %v240
    // Predicated region
    $region34: #{tpu_custom_call.1} parent=1 // pred_check
      _
    $region35: #{tpu_custom_call.1} parent=1 // pred_check_branch
      %243 = sbr.rel (0) target = $region37
    $region36: #{tpu_custom_call.1} parent=1 // pred_region
      %s245 = ssub.s32 128, 128
      %246 = vsyncadd [#allocation4], %s245
      %s248 = sshll.u32 [#allocation8], 4
      %s249 = int_to_ptr.vmem [resolvable:$true] %s248
      %251 = dma.vmem_to_hbm [thread:$0]  %s249, 128, %s5, [#allocation4]
    $region37: #{tpu_custom_call.1} parent=1 // pred_fallthru
      _
    // Predicated region
    $region38: #{tpu_custom_call.1} parent=1 // pred_check
      _
    $region39: #{tpu_custom_call.1} parent=1 // pred_check_branch
      %253 = sbr.rel (0) target = $region41
    $region40: #{tpu_custom_call.1} parent=1 // pred_region
      %254 = dma.done [#allocation4], 128
    $region41: #{tpu_custom_call.1} parent=1 // pred_fallthru
      _
    %255 = vsyncpa [#allocation3], 1
    %256 = vsyncpa [#allocation6], 1
    %257 = vsyncpa [#allocation4], 1

</llo_original>
